<compile_context>
chip_gen: v6e
topology: v6e:2x2x1
jax: 0.10.0
libtpu: 0.0.40
codegen_flags: <defaults>
</compile_context>

<pallas_src>
import functools

import jax
import jax.numpy as jnp
from jax.experimental import pallas as pl
from jax.experimental.pallas import tpu as pltpu


def _round_up(x: int, m: int) -> int:
    return ((x + m - 1) // m) * m


def _sublane_multiple(dtype) -> int:
    itemsize = jnp.dtype(dtype).itemsize
    if itemsize >= 4:
        return 8
    if itemsize == 2:
        return 16
    return 32


def _gram_linear_kernel(x_ref, wt_ref, o_ref):
    """One (tm, tn) output tile: x_ref (tm, K) @ wt_ref (K, tn) -> o_ref (tm, tn).

    W^T is lane-dense (tn lanes), the full K reduction happens in one MXU pass with f32
    accumulation, and the result is cast to the output dtype on store.
    """
    o_ref[...] = jnp.dot(
        x_ref[...], wt_ref[...], preferred_element_type=jnp.float32
    ).astype(o_ref.dtype)


def prepare_gram_weight(weight, compute_dtype=None):
    """One-time parameter prep: nn.Linear weight (V, H) -> lane-dense W^T (H, V).

    Call this once when parameters are loaded (NOT per forward call) so the transpose and any
    optional dtype cast (e.g. bf16) never add per-step HBM traffic.
    """
    wt = jnp.asarray(weight).T
    if compute_dtype is not None:
        wt = wt.astype(compute_dtype)
    return wt


@functools.partial(
    jax.jit, static_argnames=("tm", "tn", "out_dtype", "use_pallas")
)
def gram_embedding_forward(
    hidden_grammeme,
    weight_t,
    *,
    tm=None,
    tn=None,
    out_dtype=None,
    use_pallas=None,
):
    """Equivalent of GramEmbeddingLayer.forward (bias-free linear).

    hidden_grammeme: (..., H)
    weight_t:        (H, V)  -- pre-transposed weight from prepare_gram_weight()
    returns:         (..., V) in out_dtype (defaults to hidden_grammeme.dtype)
    """
    *lead, H = hidden_grammeme.shape
    K, V = weight_t.shape
    assert H == K, "hidden dim mismatch"

    out_dtype = hidden_grammeme.dtype if out_dtype is None else out_dtype
    x = hidden_grammeme.reshape(-1, H)  # (M, K)
    M, N = x.shape[0], V

    # For tiny problems a Pallas launch is pure pipeline-prime overhead; let XLA fuse it.
    if use_pallas is None:
        use_pallas = (M * N * K) >= (1 << 20)

    if not use_pallas:
        out = jnp.dot(x, weight_t, preferred_element_type=jnp.float32).astype(out_dtype)
        return out.reshape(*lead, V)

    bx = jnp.dtype(x.dtype).itemsize
    bw = jnp.dtype(weight_t.dtype).itemsize
    bo = jnp.dtype(out_dtype).itemsize
    sub = _sublane_multiple(x.dtype)

    # Large lane-dense tiles (memory-bound regime); clamp to problem size for small inputs.
    tm = tm if tm is not None else min(512, _round_up(M, sub))
    tn = tn if tn is not None else min(2048, _round_up(N, 128))
    tm = _round_up(tm, sub)
    tn = _round_up(tn, 128)

    # Keep the double-buffered working set under a budget that is safe on v7x (64 MiB physical).
    def _working_set(tm_, tn_):
        return 2 * (tm_ * K * bx + K * tn_ * bw + tm_ * tn_ * bo)

    vmem_budget = 24 * 1024 * 1024
    while _working_set(tm, tn) > vmem_budget and tn > 512:
        tn = _round_up(tn // 2, 128)
    while _working_set(tm, tn) > vmem_budget and tm > sub:
        tm = _round_up(max(tm // 2, sub), sub)

    # v7x has 2 TensorCores: avoid a degenerate (1, 1) grid when the vocab axis can be split.
    if pl.cdiv(M, tm) == 1 and pl.cdiv(N, tn) == 1 and N > 256:
        tn = _round_up(pl.cdiv(N, 2), 128)

    # Vocab tiles OUTER, row tiles INNER: the (K, tn) weight tile stays resident across the
    # inner M sweep; only the tiny (tm, K) activation tiles are re-fetched.
    grid = (pl.cdiv(N, tn), pl.cdiv(M, tm))

    cost = pl.CostEstimate(
        flops=2 * M * N * K,
        transcendentals=0,
        bytes_accessed=M * K * bx + K * N * bw + M * N * bo,
    )

    out = pl.pallas_call(
        _gram_linear_kernel,
        out_shape=jax.ShapeDtypeStruct((M, N), out_dtype),
        grid_spec=pltpu.PrefetchScalarGridSpec(
            num_scalar_prefetch=0,
            grid=grid,
            in_specs=[
                pl.BlockSpec((tm, K), lambda j, i: (i, 0)),  # activations (full K)
                pl.BlockSpec((K, tn), lambda j, i: (0, j)),  # lane-dense W^T, resident over i
            ],
            out_specs=pl.BlockSpec((tm, tn), lambda j, i: (i, j)),
        ),
        compiler_params=pltpu.CompilerParams(
            dimension_semantics=("parallel", "parallel"),
            vmem_limit_bytes=32 * 1024 * 1024,
        ),
        cost_estimate=cost,
    )(x, weight_t)

    return out.reshape(*lead, V)


if __name__ == "__main__":
    # Synthetic config: word_encoder_output_dim=32, vocab size=512 (small demo shapes).
    batch, seq = 2, 8
    hidden_dim = 32
    vocab_size = 512

    key = jax.random.PRNGKey(0)
    k_x, k_w = jax.random.split(key)

    hidden_grammeme = jax.random.normal(
        k_x, (batch, seq, hidden_dim), dtype=jnp.float32
    )

    # Deterministic init mimicking torch nn.Linear default (kaiming-uniform-ish bound).
    bound = 1.0 / (hidden_dim ** 0.5)
    weight = jax.random.uniform(
        k_w, (vocab_size, hidden_dim), dtype=jnp.float32, minval=-bound, maxval=bound
    )

    # One-time parameter prep (transpose to lane-dense W^T), done outside the forward.
    weight_t = prepare_gram_weight(weight)

    # Force the Pallas path (the demo problem is small enough to otherwise hit the jnp fallback).
    out = gram_embedding_forward(hidden_grammeme, weight_t, use_pallas=True)
    out = jax.block_until_ready(out)

    ref = hidden_grammeme @ weight.T
    assert out.shape == (batch, seq, vocab_size)
    assert jnp.allclose(out, ref, atol=1e-4, rtol=1e-4)

    # Also exercise the masked edge-block path (ragged vocab not a multiple of 128).
    ragged_vocab = 389
    weight_r = jax.random.uniform(
        k_w, (ragged_vocab, hidden_dim), dtype=jnp.float32, minval=-bound, maxval=bound
    )
    weight_r_t = prepare_gram_weight(weight_r)
    out_r = gram_embedding_forward(hidden_grammeme, weight_r_t, use_pallas=True)
    out_r = jax.block_until_ready(out_r)
    ref_r = hidden_grammeme @ weight_r.T
    assert out_r.shape == (batch, seq, ragged_vocab)
    assert jnp.allclose(out_r, ref_r, atol=1e-4, rtol=1e-4)

    print("KERNEL_OK")
</pallas_src>

<mosaic_0001>
module attributes {stable_mosaic.version = 11 : i64} {
  func.func @_gram_linear_kernel(%arg0: i32, %arg1: i32, %arg2: memref<16x32xf32, #tpu.memory_space<vmem>>, %arg3: memref<32x256xf32, #tpu.memory_space<vmem>>, %arg4: memref<16x256xf32, #tpu.memory_space<vmem>>) attributes {dimension_semantics = [#tpu.dimension_semantics<parallel>, #tpu.dimension_semantics<parallel>], iteration_bounds = array<i64: 2, 1>, scalar_prefetch = 0 : i64, scratch_operands = 0 : i64, tpu.core_type = #tpu.core_type<tc>, window_params = [{transform_indices = @transform_0, window_bounds = array<i64: 16, 32>}, {transform_indices = @transform_1, window_bounds = array<i64: 32, 256>}, {transform_indices = @transform_2, window_bounds = array<i64: 16, 256>}]} {
    %c0 = arith.constant 0 : index
    %c0_0 = arith.constant 0 : index
    %0 = vector.load %arg2[%c0, %c0_0] : memref<16x32xf32, #tpu.memory_space<vmem>>, vector<16x32xf32>
    %c0_1 = arith.constant 0 : index
    %c0_2 = arith.constant 0 : index
    %1 = vector.load %arg3[%c0_1, %c0_2] : memref<32x256xf32, #tpu.memory_space<vmem>>, vector<32x256xf32>
    %cst = arith.constant dense<0.000000e+00> : vector<16x256xf32>
    %2 = tpu.matmul %0, %1, %cst {dimension_numbers = #tpu.dot_dimension_numbers<[1], [0], [0], [1], [0, 0, 1, 1], [], []>} : vector<16x32xf32>, vector<32x256xf32>, vector<16x256xf32> -> vector<16x256xf32>
    %c0_3 = arith.constant 0 : index
    %c0_4 = arith.constant 0 : index
    %3 = vector.load %arg4[%c0_3, %c0_4] : memref<16x256xf32, #tpu.memory_space<vmem>>, vector<16x256xf32>
    tpu.vector_store %arg4[%c0_3, %c0_4], %2 {strides = array<i32>} : memref<16x256xf32, #tpu.memory_space<vmem>>, vector<16x256xf32>,
    return
  }
  func.func @transform_0(%arg0: i32, %arg1: i32) -> (i32, i32) {
    %c0_i32 = arith.constant 0 : i32
    %c0_i32_0 = arith.constant 0 : i32
    return %arg1, %c0_i32 : i32, i32
  }
  func.func @transform_1(%arg0: i32, %arg1: i32) -> (i32, i32) {
    %c0_i32 = arith.constant 0 : i32
    %c0_i32_0 = arith.constant 0 : i32
    return %c0_i32, %arg0 : i32, i32
  }
  func.func @transform_2(%arg0: i32, %arg1: i32) -> (i32, i32) {
    %c0_i32 = arith.constant 0 : i32
    return %arg1, %arg0 : i32, i32
  }
}

</mosaic_0001>

<llo_original>
// kernel: gram_embedding_forward.1
$region0: #{gram_embedding_forward.1}
  #allocation0 [shape = 'u32[]', space=smem, size = 0x4, offset = 0x4, fixed_abs, tag = 'smem constant byte address 0x4 - core index']
  #allocation1 [shape = 'u32[144,128]{1,0:T(1,128)}', space=vmem, size = 0x12000, scoped, tag = 'internal scratch']
  %s0 = inlined_call_operand.hbm [shape: f32[16,32], index: 0, kind: input, shape index: {}]
  %s1 = inlined_call_operand.hbm [shape: f32[32,512], index: 1, kind: input, shape index: {}]
  %s2 = inlined_call_operand.hbm [shape: f32[16,512], index: 2, kind: output, shape index: {}]
  %s3 = sld [smem:[#allocation0]]
  $region49: #{gram_embedding_forward.1} parent=0
    _
  %s5 = ssub.s32 1, %s3
  %s6 = scalar_select 0, %s5, %s3
  $region1: #{gram_embedding_forward.1} parent=0
    #allocation2 [shape = 'u8[8192]{0}', space=vmem, size = 0x2000, scoped, tag = 'input window, operand 0, single buffered']
    #allocation3 [shape = 's32[2]{0}', space=sflag, size = 0x8, scoped, tag = 'scoped memory for gram_embedding_forward.1']
    #allocation4 [shape = 's32[2]{0}', space=sflag, size = 0x8, scoped, tag = 'scoped memory for gram_embedding_forward.1']
    #allocation5 [shape = 'u8[65536]{0}', space=vmem, size = 0x10000, scoped, tag = 'input window, operand 1']
    #allocation6 [shape = 's32[2]{0}', space=sflag, size = 0x8, scoped, tag = 'scoped memory for gram_embedding_forward.1']
    #allocation7 [shape = 'u8[32768]{0}', space=vmem, size = 0x8000, scoped, tag = 'output window, operand 0']
    %7 = vsyncpa [#allocation3], 0
    %8 = vsyncpa [#allocation6], 0
    %s9 = scalar_lea.sflag [#allocation6], 1
    %10 = vsyncpa %s9, 0
    %11 = vsyncpa [#allocation4], 0
    %s12 = scalar_lea.sflag [#allocation4], 1
    %13 = vsyncpa %s12, 0
    loop: start=0, step=1, limit=4
    $region2: #{gram_embedding_forward.1} parent=1 // loop_pre_header
      _
    $region3: #{gram_embedding_forward.1} parent=1 // loop_header
      %s15 = sphi 0, %s19
      %p16 = scmp.ge.s32.totalorder %s15, 4
      %s22 = sphi 0, %s34
      %s23 = sphi 0, %s30
      %s24 = sphi 0, %s22
      %s25 = sphi 0, %s23
      %s26 = sphi 0, %s24
      %s27 = sphi 0, %s25
      %s37 = sphi 0, %s39
      %s40 = sphi 0, %s37
      %s41 = sphi 0, %s40
      %s57 = sphi 0, %s41
      %s63 = sphi 0, %s65
      %s66 = sphi 0, %s63
      %s67 = sphi 0, %s66
      %s83 = sphi 0, %s67
      %s91 = sphi 0, %s93
      %s94 = sphi 0, %s91
      %s95 = sphi 0, %s94
      %s111 = sphi 0, %s95
    $region4: #{gram_embedding_forward.1} parent=1 // loop_header_branch
      %18 = sbr.rel (%p16) target = $region8
    $region5: #{gram_embedding_forward.1} parent=1 // loop_body
      %s20 = ssub.s32 %s15, 1
      %s21 = ssub.s32 %s15, 2
      %s28 = sadd.s32 1, %s23
      %p29 = scmp.ge.s32.totalorder %s28, 1
      %s30 = scalar_select %p29, 0, %s28
      %s31 = sadd.s32 1, %s22
      %s32 = scalar_select %p29, %s31, %s22
      %p33 = scmp.ge.s32.totalorder %s32, 2
      %s34 = scalar_select %p33, 0, %s32
      %s35 = ssub.s32 %s23, %s30
      %p36 = scmp.eq.s32.totalorder %s35, 0
      %s38 = sadd.s32 %s37, 1
      %s39 = scalar_select %p36, %s37, %s38
      %p42 = pneg %p36
      %p43 = scmp.eq.s32.totalorder %s15, 1
      %p44 = por %p42, %p43
      %p45 = scmp.ne.s32.totalorder %s37, %s40
      %p46 = scmp.eq.s32.totalorder %s15, 0
      %p47 = por %p45, %p46
      %p48 = scmp.ne.s32.totalorder %s37, %s40
      %p49 = scmp.eq.s32.totalorder %s20, 1
      %p50 = por %p48, %p49
      %p51 = scmp.ne.s32.totalorder %s40, %s41
      %p52 = scmp.eq.s32.totalorder %s20, 0
      %p53 = por %p51, %p52
      %p54 = scmp.ne.s32.totalorder %s40, %s41
      %p55 = scmp.eq.s32.totalorder %s21, 1
      %p56 = por %p54, %p55
      %p58 = scmp.ne.s32.totalorder %s41, %s57
      %p59 = scmp.eq.s32.totalorder %s21, 0
      %p60 = por %p58, %p59
      %s61 = ssub.s32 %s22, %s34
      %p62 = scmp.eq.s32.totalorder %s61, 0
      %s64 = sadd.s32 %s63, 1
      %s65 = scalar_select %p62, %s63, %s64
      %p68 = pneg %p62
      %p69 = scmp.eq.s32.totalorder %s15, 1
      %p70 = por %p68, %p69
      %p71 = scmp.ne.s32.totalorder %s63, %s66
      %p72 = scmp.eq.s32.totalorder %s15, 0
      %p73 = por %p71, %p72
      %p74 = scmp.ne.s32.totalorder %s63, %s66
      %p75 = scmp.eq.s32.totalorder %s20, 1
      %p76 = por %p74, %p75
      %p77 = scmp.ne.s32.totalorder %s66, %s67
      %p78 = scmp.eq.s32.totalorder %s20, 0
      %p79 = por %p77, %p78
      %p80 = scmp.ne.s32.totalorder %s66, %s67
      %p81 = scmp.eq.s32.totalorder %s21, 1
      %p82 = por %p80, %p81
      %p84 = scmp.ne.s32.totalorder %s67, %s83
      %p85 = scmp.eq.s32.totalorder %s21, 0
      %p86 = por %p84, %p85
      %s87 = ssub.s32 %s23, %s30
      %s88 = ssub.s32 %s22, %s34
      %s89 = sor.u32 %s87, %s88
      %p90 = scmp.eq.s32.totalorder %s89, 0
      %s92 = sadd.s32 %s91, 1
      %s93 = scalar_select %p90, %s91, %s92
      %p96 = pneg %p90
      %p97 = scmp.eq.s32.totalorder %s15, 1
      %p98 = por %p96, %p97
      %p99 = scmp.ne.s32.totalorder %s91, %s94
      %p100 = scmp.eq.s32.totalorder %s15, 0
      %p101 = por %p99, %p100
      %p102 = scmp.ne.s32.totalorder %s91, %s94
      %p103 = scmp.eq.s32.totalorder %s20, 1
      %p104 = por %p102, %p103
      %p105 = scmp.ne.s32.totalorder %s94, %s95
      %p106 = scmp.eq.s32.totalorder %s20, 0
      %p107 = por %p105, %p106
      %p108 = scmp.ne.s32.totalorder %s94, %s95
      %p109 = scmp.eq.s32.totalorder %s21, 1
      %p110 = por %p108, %p109
      %p112 = scmp.ne.s32.totalorder %s95, %s111
      %p113 = scmp.eq.s32.totalorder %s21, 0
      %p114 = por %p112, %p113
      %p115 = scmp.le.s32.totalorder 1, %s15
      %p116 = scmp.lt.s32.totalorder %s15, 3
      %p117 = pnand %p115, %p116
      %p118 = pneg %p117
      // Predicated region
      $region9: #{gram_embedding_forward.1} parent=5 // pred_check
        _
      $region10: #{gram_embedding_forward.1} parent=5 // pred_check_branch
        %120 = sbr.rel (%p117) target = $region12
      $region11: #{gram_embedding_forward.1} parent=5 // pred_region
        %s121 = ssub.s32 %s15, 1
        // Predicated region
        $region13: #{gram_embedding_forward.1} parent=11 // pred_check
          %p122 = pneg %p53
        $region14: #{gram_embedding_forward.1} parent=11 // pred_check_branch
          %124 = sbr.rel (%p122) target = $region16
        $region15: #{gram_embedding_forward.1} parent=11 // pred_region
          %s125 = smul.u32 2, %s25
          %s127 = ssub.s32 256, 256
          %128 = vsyncadd [#allocation3], %s127
          %s129 = smul.addr %s125, 128
          %s130 = scalar_lea.hbm %s0, %s129
          %s131 = sshll.u32 [#allocation2], 4
          %s132 = int_to_ptr.vmem [resolvable:$true] %s131
          %137 = dma.hbm_to_vmem [thread:$0]  %s130, 256, %s132, [#allocation3], 128, 128, 8
        $region16: #{gram_embedding_forward.1} parent=11 // pred_fallthru
          _
      $region12: #{gram_embedding_forward.1} parent=5 // pred_fallthru
        _
      %p138 = scmp.lt.s32.totalorder %s15, 2
      // Predicated region
      $region17: #{gram_embedding_forward.1} parent=5 // pred_check
        %p139 = pneg %p138
      $region18: #{gram_embedding_forward.1} parent=5 // pred_check_branch
        %141 = sbr.rel (%p139) target = $region20
      $region19: #{gram_embedding_forward.1} parent=5 // pred_region
        // Predicated region
        $region21: #{gram_embedding_forward.1} parent=19 // pred_check
          %p142 = pneg %p73
        $region22: #{gram_embedding_forward.1} parent=19 // pred_check_branch
          %144 = sbr.rel (%p142) target = $region24
        $region23: #{gram_embedding_forward.1} parent=19 // pred_region
          %s145 = sand.u32 %s63, 1
          %s146 = scalar_lea.sflag [#allocation6], %s145
          %s147 = sand.u32 %s63, 1
          %s148 = smul.addr %s147, 64
          %s149 = scalar_lea.vmem [#allocation5], %s148
          %s150 = smul.u32 2, %s22
          %s152 = ssub.s32 1024, 1024
          %153 = vsyncadd %s146, %s152
          %s154 = smul.addr %s150, 128
          %s155 = scalar_lea.hbm %s1, %s154
          %s156 = sshll.u32 %s149, 4
          %s157 = int_to_ptr.vmem [resolvable:$true] %s156
          %162 = dma.hbm_to_vmem [thread:$0]  %s155, 1024, %s157, %s146, 512, 256, 16
        $region24: #{gram_embedding_forward.1} parent=19 // pred_fallthru
          _
      $region20: #{gram_embedding_forward.1} parent=5 // pred_fallthru
        _
      %p163 = scmp.le.s32.totalorder 1, %s15
      %p164 = scmp.lt.s32.totalorder %s15, 3
      %p165 = pnand %p163, %p164
      %p166 = pneg %p165
      // Predicated region
      $region25: #{gram_embedding_forward.1} parent=5 // pred_check
        _
      $region26: #{gram_embedding_forward.1} parent=5 // pred_check_branch
        %168 = sbr.rel (%p165) target = $region28
      $region27: #{gram_embedding_forward.1} parent=5 // pred_region
        %s169 = ssub.s32 %s15, 1
        // Predicated region
        $region29: #{gram_embedding_forward.1} parent=27 // pred_check
          %p170 = pneg %p53
        $region30: #{gram_embedding_forward.1} parent=27 // pred_check_branch
          %172 = sbr.rel (%p170) target = $region32
        $region31: #{gram_embedding_forward.1} parent=27 // pred_region
          %173 = dma.done [#allocation3], 256
        $region32: #{gram_embedding_forward.1} parent=27 // pred_fallthru
          _
        %s174 = sand.u32 %s66, 1
        %s175 = scalar_lea.sflag [#allocation6], %s174
        %s176 = sand.u32 %s66, 1
        %s177 = smul.addr %s176, 64
        %s178 = scalar_lea.vmem [#allocation5], %s177
        // Predicated region
        $region33: #{gram_embedding_forward.1} parent=27 // pred_check
          %p179 = pneg %p79
        $region34: #{gram_embedding_forward.1} parent=27 // pred_check_branch
          %181 = sbr.rel (%p179) target = $region36
        $region35: #{gram_embedding_forward.1} parent=27 // pred_region
          %182 = dma.done %s175, 1024
        $region36: #{gram_embedding_forward.1} parent=27 // pred_fallthru
          _
        %p183 = pneg %p53
        %p184 = pneg %p50
        %s185 = sand.u32 %s66, 1
        %s186 = scalar_lea.sflag [#allocation6], %s185
        %s187 = sand.u32 %s66, 1
        %s188 = smul.addr %s187, 64
        %s189 = scalar_lea.vmem [#allocation5], %s188
        %p190 = pneg %p79
        %p191 = pneg %p76
        %p192 = pneg %p107
        %p193 = pneg %p104
        %s194 = sand.u32 %s94, 1
        %s195 = scalar_lea.sflag [#allocation4], %s194
        %s196 = sand.u32 %s94, 1
        %s197 = smul.addr %s196, 32
        %s198 = scalar_lea.vmem [#allocation7], %s197
        %s199 = smul.u32 2, %s25
        %s200 = smul.u32 2, %s24
        %s201 = smul.u32 2, %s25
        %s202 = smul.u32 2, %s24
        %v203 = vld [vmem:[#allocation2] sm:$0xff]
        %v204 = vld [vmem:[#allocation2 + $0x8] sm:$0xff]
        %v205 = vld [vmem:[%s178] sm:$0xff]
        %v206 = vld [vmem:[%s178 + $0x8] sm:$0xff]
        %v207 = vld [vmem:[%s178 + $0x10] sm:$0xff]
        %v208 = vld [vmem:[%s178 + $0x18] sm:$0xff]
        %v209 = vld [vmem:[%s178 + $0x20] sm:$0xff]
        %v210 = vld [vmem:[%s178 + $0x28] sm:$0xff]
        %v211 = vld [vmem:[%s178 + $0x30] sm:$0xff]
        %v212 = vld [vmem:[%s178 + $0x38] sm:$0xff]
        %vm213 = vcmask 261120
        %v215 = vsel %vm213, %v203, 0
        %v218 = vsel %vm213, %v204, 0
        %220 = vmatprep.subr.mxu0 0.0
        %221 = vmatpush1.msra.mxu0 0.0
        %222 = vmatprep.subr.mxu0 0.0
        %223 = vmatpush1.msra.mxu0 0.0
        %224 = vmatprep.subr.mxu0 0.0
        %225 = vmatpush1.msra.mxu0 0.0
        %226 = vmatprep.subr.mxu0 0.0
        %227 = vmatpush1.msra.mxu0 0.0
        %228 = vmatprep.subr.mxu0 0.0
        %229 = vmatpush1.msra.mxu0 0.0
        %230 = vmatprep.subr.mxu0 0.0
        %231 = vmatpush1.msra.mxu0 0.0
        %232 = vmatprep.subr.mxu0 0.0
        %233 = vmatpush1.msra.mxu0 0.0
        %234 = vmatprep.subr.mxu0 0.0
        %235 = vmatpush1.msra.mxu0 0.0
        %236 = vmatprep.subr.mxu0 0.0
        %237 = vmatpush1.msra.mxu0 0.0
        %238 = vmatprep.subr.mxu0 0.0
        %239 = vmatpush1.msra.mxu0 0.0
        %240 = vmatprep.subr.mxu0 0.0
        %241 = vmatpush1.msra.mxu0 0.0
        %242 = vmatprep.subr.mxu0 0.0
        %243 = vmatpush1.msra.mxu0 0.0
        %244 = vmatprep.subr.mxu0 %v212
        %245 = vmatpush1.msra.mxu0 %v211
        %246 = vmatprep.subr.mxu0 %v210
        %247 = vmatpush1.msra.mxu0 %v209
        %248 = vmatprep.subr.mxu0 %v208
        %249 = vmatpush1.msra.mxu0 %v207
        %250 = vmatprep.subr.mxu0 %v206
        %251 = vmatpush1.msra.mxu0 %v205
        %252 = vmatprep.subr.mxu0 0.0
        %253 = vmatpush2.msra.mxu0 0.0
        %254 = vmatprep.subr.mxu0 0.0
        %255 = vmatpush2.msra.mxu0 0.0
        %256 = vmatprep.subr.mxu0 0.0
        %257 = vmatpush2.msra.mxu0 0.0
        %258 = vmatprep.subr.mxu0 0.0
        %259 = vmatpush2.msra.mxu0 0.0
        %260 = vmatprep.subr.mxu0 0.0
        %261 = vmatpush2.msra.mxu0 0.0
        %262 = vmatprep.subr.mxu0 0.0
        %263 = vmatpush2.msra.mxu0 0.0
        %264 = vmatprep.subr.mxu0 0.0
        %265 = vmatpush2.msra.mxu0 0.0
        %266 = vmatprep.subr.mxu0 0.0
        %267 = vmatpush2.msra.mxu0 0.0
        %268 = vmatprep.subr.mxu0 0.0
        %269 = vmatpush2.msra.mxu0 0.0
        %270 = vmatprep.subr.mxu0 0.0
        %271 = vmatpush2.msra.mxu0 0.0
        %272 = vmatprep.subr.mxu0 0.0
        %273 = vmatpush2.msra.mxu0 0.0
        %274 = vmatprep.subr.mxu0 0.0
        %275 = vmatpush2.msra.mxu0 0.0
        %276 = vmatprep.subr.mxu0 0.0
        %277 = vmatpush2.msra.mxu0 0.0
        %278 = vmatprep.subr.mxu0 0.0
        %279 = vmatpush2.msra.mxu0 0.0
        %280 = vmatprep.subr.mxu0 0.0
        %281 = vmatpush2.msra.mxu0 0.0
        %282 = vmatprep.subr.mxu0 0.0
        %283 = vmatpush2.msra.mxu0 0.0
        %284 = vmatprep.mubr.f32.mxu0 0.0
        %285 = vmatmul.mubr.f32.gmra.mxu0 %v215
        %v286 = vpop.f32.mrf.mxu0
        %v287 = vadd.f32 0.0, %v286
        %v288 = vpop.f32.mrf.mxu0
        %v289 = vadd.f32 0.0, %v288
        %290 = vmatprep.mubr.f32.mxu0 0.0
        %291 = vmatmul.mubr.f32.gmra.mxu0 %v218
        %v292 = vpop.f32.mrf.mxu0
        %v293 = vadd.f32 0.0, %v292
        %v294 = vpop.f32.mrf.mxu0
        %v295 = vadd.f32 0.0, %v294
        %296 = vdwg.mxu0
        %297 = vst [vmem:[%s198] sm:$0xff] %v287
        %298 = vst [vmem:[%s198 + $0x8] sm:$0xff] %v289
        %299 = vst [vmem:[%s198 + $0x10] sm:$0xff] %v293
        %300 = vst [vmem:[%s198 + $0x18] sm:$0xff] %v295
        %s301 = sand.u32 %s94, 1
        %s302 = scalar_lea.sflag [#allocation4], %s301
        %s303 = sand.u32 %s94, 1
        %s304 = smul.addr %s303, 32
        %s305 = scalar_lea.vmem [#allocation7], %s304
        // Predicated region
        $region37: #{gram_embedding_forward.1} parent=27 // pred_check
          %p306 = pneg %p104
        $region38: #{gram_embedding_forward.1} parent=27 // pred_check_branch
          %308 = sbr.rel (%p306) target = $region40
        $region39: #{gram_embedding_forward.1} parent=27 // pred_region
          %s309 = smul.u32 2, %s25
          %s310 = smul.u32 2, %s24
          %s312 = ssub.s32 512, 512
          %313 = vsyncadd %s302, %s312
          %s314 = smul.addr %s309, 4
          %s315 = sadd.s32 %s310, %s314
          %s316 = smul.addr %s315, 128
          %s317 = scalar_lea.hbm %s2, %s316
          %s318 = sshll.u32 %s305, 4
          %s319 = int_to_ptr.vmem [resolvable:$true] %s318
          %324 = dma.vmem_to_hbm [thread:$0]  %s319, 512, %s317, %s302, 256, 512, 16
        $region40: #{gram_embedding_forward.1} parent=27 // pred_fallthru
          _
      $region28: #{gram_embedding_forward.1} parent=5 // pred_fallthru
        _
      %p325 = scmp.le.s32.totalorder 2, %s15
      // Predicated region
      $region41: #{gram_embedding_forward.1} parent=5 // pred_check
        %p326 = pneg %p325
      $region42: #{gram_embedding_forward.1} parent=5 // pred_check_branch
        %328 = sbr.rel (%p326) target = $region44
      $region43: #{gram_embedding_forward.1} parent=5 // pred_region
        %s329 = ssub.s32 %s15, 2
        // Predicated region
        $region45: #{gram_embedding_forward.1} parent=43 // pred_check
          %p330 = pneg %p110
        $region46: #{gram_embedding_forward.1} parent=43 // pred_check_branch
          %332 = sbr.rel (%p330) target = $region48
        $region47: #{gram_embedding_forward.1} parent=43 // pred_region
          %s333 = sand.u32 %s95, 1
          %s334 = scalar_lea.sflag [#allocation4], %s333
          %s335 = sand.u32 %s95, 1
          %s336 = smul.addr %s335, 32
          %s337 = scalar_lea.vmem [#allocation7], %s336
          %338 = dma.done %s334, 512
        $region48: #{gram_embedding_forward.1} parent=43 // pred_fallthru
          _
      $region44: #{gram_embedding_forward.1} parent=5 // pred_fallthru
        _
    $region6: #{gram_embedding_forward.1} parent=1 // loop_footer
      %s19 = sadd.s32 1, %s15
    $region7: #{gram_embedding_forward.1} parent=1 // loop_footer_branch
      %14 = sbr.rel target = $region3
    $region8: #{gram_embedding_forward.1} parent=1 // loop_exit
      _
    %339 = vsyncpa [#allocation3], 1
    %s340 = scalar_lea.sflag [#allocation3], 1
    %341 = vsyncpa %s340, 1
    %342 = vsyncpa [#allocation6], 1
    %s343 = scalar_lea.sflag [#allocation6], 1
    %344 = vsyncpa %s343, 1
    %345 = vsyncpa [#allocation4], 1
    %s346 = scalar_lea.sflag [#allocation4], 1
    %347 = vsyncpa %s346, 1

</llo_original>
